<compile_context>
chip_gen: v7x
topology: tpu7x:2x2x1
jax: 0.10.0
libtpu: 0.0.40
codegen_flags: <defaults>
</compile_context>

<pallas_src>
import jax
import jax.numpy as jnp
from jax.experimental import pallas as pl
from jax.experimental.pallas import tpu as pltpu


def _round_up(x, m):
    return (x + m - 1) // m * m


def mlp_kernel(x_ref, w1_ref, b1_ref, w2_ref, b2_ref, out_ref):
    # hidden = relu(x @ w1 + b1); f32 accumulation on the MXU.
    h = jnp.dot(x_ref[...], w1_ref[...], preferred_element_type=jnp.float32)
    h = jnp.maximum(h + b1_ref[...], 0.0)        # b1 is (1, Hp) -> broadcast over rows
    # y = h @ w2 + b2 ; Hp=128 fills the MXU K dim, Op=128 gives lane-dense stores.
    y = jnp.dot(h, w2_ref[...], preferred_element_type=jnp.float32)
    out_ref[...] = (y + b2_ref[...]).astype(out_ref.dtype)


def net_forward(x, w1, b1, w2, b2, *, max_tile_rows=512):
    """Pallas equivalent of Net.forward: relu(x @ w1 + b1) @ w2 + b2."""
    B, F = x.shape
    H = w1.shape[1]
    O = w2.shape[1]

    # Lane-dense zero padding of the hidden/output dims (keeps the math exact:
    # padded w2 rows are zero and relu(0 + 0) = 0 for padded hidden columns).
    Hp = _round_up(H, 128)
    Op = _round_up(O, 128)
    w1p = jnp.pad(w1, ((0, 0), (0, Hp - H)))
    b1p = jnp.pad(b1, ((0, 0), (0, Hp - H)))
    w2p = jnp.pad(w2, ((0, Hp - H), (0, Op - O)))
    b2p = jnp.pad(b2, ((0, 0), (0, Op - O)))

    # Batch tiling: as large as useful (amortizes ~0.35 us/step), multiple of 8 sublanes.
    TM = min(max_tile_rows, _round_up(B, 8))
    Bp = _round_up(B, TM)
    xp = jnp.pad(x, ((0, Bp - B), (0, 0)))
    grid = (Bp // TM,)

    # VMEM budget: double-buffered x/out tiles + resident weights/biases (+ headroom).
    def tile_bytes(r, c, itemsize=4):
        return _round_up(r, 8) * _round_up(c, 128) * itemsize

    needed = (2 * tile_bytes(TM, F) + 2 * tile_bytes(TM, Op)
              + tile_bytes(F, Hp) + tile_bytes(1, Hp)
              + tile_bytes(Hp, Op) + tile_bytes(1, Op))
    vmem_limit = min(max(needed + (4 << 20), 16 << 20), 64 << 20)  # cap: v7x VMEM/TC

    cost = pl.CostEstimate(
        flops=2 * B * F * H + 2 * B * H * O,
        transcendentals=0,
        bytes_accessed=4 * (B * F + F * H + H + H * O + O + B * O),
    )

    out_padded = pl.pallas_call(
        mlp_kernel,
        out_shape=jax.ShapeDtypeStruct((Bp, Op), jnp.float32),
        grid=grid,
        in_specs=[
            pl.BlockSpec((TM, F), lambda i: (i, 0)),    # x: streamed per batch tile
            pl.BlockSpec((F, Hp), lambda i: (0, 0)),    # w1: VMEM-resident across grid
            pl.BlockSpec((1, Hp), lambda i: (0, 0)),    # b1: VMEM-resident
            pl.BlockSpec((Hp, Op), lambda i: (0, 0)),   # w2: VMEM-resident
            pl.BlockSpec((1, Op), lambda i: (0, 0)),    # b2: VMEM-resident
        ],
        out_specs=pl.BlockSpec((TM, Op), lambda i: (i, 0)),
        compiler_params=pltpu.CompilerParams(
            dimension_semantics=("parallel",),          # 2 TensorCores on v7x
            vmem_limit_bytes=vmem_limit,
        ),
        cost_estimate=cost,
    )(xp, w1p, b1p, w2p, b2p)

    return out_padded[:B, :O]


def init_params(key, n_features, n_hiddens, n_output):
    # Deterministic init mimicking torch.nn.Linear (uniform +/- 1/sqrt(fan_in)).
    k1, k2, k3, k4 = jax.random.split(key, 4)
    lim1 = 1.0 / jnp.sqrt(jnp.float32(n_features))
    lim2 = 1.0 / jnp.sqrt(jnp.float32(n_hiddens))
    w1 = jax.random.uniform(k1, (n_features, n_hiddens), jnp.float32, -lim1, lim1)
    b1 = jax.random.uniform(k2, (1, n_hiddens), jnp.float32, -lim1, lim1)
    w2 = jax.random.uniform(k3, (n_hiddens, n_output), jnp.float32, -lim2, lim2)
    b2 = jax.random.uniform(k4, (1, n_output), jnp.float32, -lim2, lim2)
    return w1, b1, w2, b2


if __name__ == "__main__":
    # Small shapes consistent with the module's usage (2 features, 2 classes).
    B, n_features, n_hiddens, n_output = 8, 2, 32, 2

    key = jax.random.PRNGKey(0)
    kx, kp = jax.random.split(key)

    # Synthetic inputs resembling the two Gaussian clusters in the script.
    x_pos = 2.0 + jax.random.normal(kx, (B // 2, n_features), jnp.float32)
    x_neg = -2.0 + jax.random.normal(jax.random.fold_in(kx, 1),
                                     (B // 2, n_features), jnp.float32)
    x = jnp.concatenate([x_pos, x_neg], axis=0)

    w1, b1, w2, b2 = init_params(kp, n_features, n_hiddens, n_output)

    out = net_forward(x, w1, b1, w2, b2)
    out = jax.block_until_ready(out)

    # Pure-JAX reference check of the same math.
    ref = jnp.maximum(x @ w1 + b1, 0.0) @ w2 + b2
    assert out.shape == (B, n_output)
    assert jnp.allclose(out, ref, atol=1e-5, rtol=1e-5)

    print("KERNEL_OK")
</pallas_src>

<mosaic_0001>
module attributes {stable_mosaic.version = 11 : i64} {
  func.func @mlp_kernel(%arg0: i32, %arg1: memref<8x2xf32, #tpu.memory_space<vmem>>, %arg2: memref<2x128xf32, #tpu.memory_space<vmem>>, %arg3: memref<1x128xf32, #tpu.memory_space<vmem>>, %arg4: memref<128x128xf32, #tpu.memory_space<vmem>>, %arg5: memref<1x128xf32, #tpu.memory_space<vmem>>, %arg6: memref<8x128xf32, #tpu.memory_space<vmem>>) attributes {dimension_semantics = [#tpu.dimension_semantics<parallel>], iteration_bounds = array<i64: 1>, scalar_prefetch = 0 : i64, scratch_operands = 0 : i64, tpu.core_type = #tpu.core_type<tc>, window_params = [{transform_indices = @transform_0, window_bounds = array<i64: 8, 2>}, {pipeline_mode = #tpu.pipeline_mode<synchronous>, transform_indices = @transform_1, window_bounds = array<i64: 2, 128>}, {pipeline_mode = #tpu.pipeline_mode<synchronous>, transform_indices = @transform_2, window_bounds = array<i64: 1, 128>}, {pipeline_mode = #tpu.pipeline_mode<synchronous>, transform_indices = @transform_3, window_bounds = array<i64: 128, 128>}, {pipeline_mode = #tpu.pipeline_mode<synchronous>, transform_indices = @transform_4, window_bounds = array<i64: 1, 128>}, {transform_indices = @transform_5, window_bounds = array<i64: 8, 128>}]} {
    %c0 = arith.constant 0 : index
    %c0_0 = arith.constant 0 : index
    %0 = vector.load %arg1[%c0, %c0_0] : memref<8x2xf32, #tpu.memory_space<vmem>>, vector<8x2xf32>
    %c0_1 = arith.constant 0 : index
    %c0_2 = arith.constant 0 : index
    %1 = vector.load %arg2[%c0_1, %c0_2] : memref<2x128xf32, #tpu.memory_space<vmem>>, vector<2x128xf32>
    %cst = arith.constant dense<0.000000e+00> : vector<8x128xf32>
    %2 = tpu.matmul %0, %1, %cst {dimension_numbers = #tpu.dot_dimension_numbers<[1], [0], [0], [1], [0, 0, 1, 1], [], []>} : vector<8x2xf32>, vector<2x128xf32>, vector<8x128xf32> -> vector<8x128xf32>
    %c0_3 = arith.constant 0 : index
    %c0_4 = arith.constant 0 : index
    %3 = vector.load %arg3[%c0_3, %c0_4] : memref<1x128xf32, #tpu.memory_space<vmem>>, vector<1x128xf32>
    %4 = vector.broadcast %3 : vector<1x128xf32> to vector<8x128xf32>
    %5 = arith.addf %2, %4 : vector<8x128xf32>
    %cst_5 = arith.constant 0.000000e+00 : f32
    %6 = vector.broadcast %cst_5 : f32 to vector<8x128xf32>
    %7 = arith.maximumf %5, %6 : vector<8x128xf32>
    %c0_6 = arith.constant 0 : index
    %c0_7 = arith.constant 0 : index
    %8 = vector.load %arg4[%c0_6, %c0_7] : memref<128x128xf32, #tpu.memory_space<vmem>>, vector<128x128xf32>
    %cst_8 = arith.constant dense<0.000000e+00> : vector<8x128xf32>
    %9 = tpu.matmul %7, %8, %cst_8 {dimension_numbers = #tpu.dot_dimension_numbers<[1], [0], [0], [1], [0, 0, 1, 1], [], []>} : vector<8x128xf32>, vector<128x128xf32>, vector<8x128xf32> -> vector<8x128xf32>
    %c0_9 = arith.constant 0 : index
    %c0_10 = arith.constant 0 : index
    %10 = vector.load %arg5[%c0_9, %c0_10] : memref<1x128xf32, #tpu.memory_space<vmem>>, vector<1x128xf32>
    %11 = vector.broadcast %10 : vector<1x128xf32> to vector<8x128xf32>
    %12 = arith.addf %9, %11 : vector<8x128xf32>
    %c0_11 = arith.constant 0 : index
    %c0_12 = arith.constant 0 : index
    %13 = vector.load %arg6[%c0_11, %c0_12] : memref<8x128xf32, #tpu.memory_space<vmem>>, vector<8x128xf32>
    tpu.vector_store %arg6[%c0_11, %c0_12], %12 {strides = array<i32>} : memref<8x128xf32, #tpu.memory_space<vmem>>, vector<8x128xf32>,
    return
  }
  func.func @transform_0(%arg0: i32) -> (i32, i32) {
    %c0_i32 = arith.constant 0 : i32
    %c0_i32_0 = arith.constant 0 : i32
    return %arg0, %c0_i32 : i32, i32
  }
  func.func @transform_1(%arg0: i32) -> (i32, i32) {
    %c0_i32 = arith.constant 0 : i32
    %c0_i32_0 = arith.constant 0 : i32
    %c0_i32_1 = arith.constant 0 : i32
    return %c0_i32, %c0_i32_0 : i32, i32
  }
  func.func @transform_2(%arg0: i32) -> (i32, i32) {
    %c0_i32 = arith.constant 0 : i32
    %c0_i32_0 = arith.constant 0 : i32
    %c0_i32_1 = arith.constant 0 : i32
    return %c0_i32, %c0_i32_0 : i32, i32
  }
  func.func @transform_3(%arg0: i32) -> (i32, i32) {
    %c0_i32 = arith.constant 0 : i32
    %c0_i32_0 = arith.constant 0 : i32
    %c0_i32_1 = arith.constant 0 : i32
    return %c0_i32, %c0_i32_0 : i32, i32
  }
  func.func @transform_4(%arg0: i32) -> (i32, i32) {
    %c0_i32 = arith.constant 0 : i32
    %c0_i32_0 = arith.constant 0 : i32
    %c0_i32_1 = arith.constant 0 : i32
    return %c0_i32, %c0_i32_0 : i32, i32
  }
  func.func @transform_5(%arg0: i32) -> (i32, i32) {
    %c0_i32 = arith.constant 0 : i32
    %c0_i32_0 = arith.constant 0 : i32
    return %arg0, %c0_i32 : i32, i32
  }
}

</mosaic_0001>

<llo_original>
// kernel: tpu_custom_call.1
$region0: #{tpu_custom_call.1}
  #allocation0 [shape = 'u32[]', space=smem, size = 0x4, offset = 0x4, fixed_abs, tag = 'smem constant byte address 0x4 - core index']
  #allocation1 [shape = 'u32[144,128]{1,0:T(1,128)}', space=vmem, size = 0x12000, scoped, tag = 'internal scratch']
  %s0 = inlined_call_operand.vmem [shape: f32[8,2], index: 0, kind: input, shape index: {}]
  %s1 = inlined_call_operand.vmem [shape: f32[2,128], index: 1, kind: input, shape index: {}]
  %s2 = inlined_call_operand.vmem [shape: f32[1,128], index: 2, kind: input, shape index: {}]
  %s3 = inlined_call_operand.hbm [shape: f32[128,128], index: 3, kind: input, shape index: {}]
  %s4 = inlined_call_operand.vmem [shape: f32[1,128], index: 4, kind: input, shape index: {}]
  %s5 = inlined_call_operand.hbm [shape: f32[8,128], index: 5, kind: output, shape index: {}]
  %s6 = sld [smem:[#allocation0]]
  $region34: #{tpu_custom_call.1} parent=0
    _
  %s8 = ssub.s32 1, %s6
  %s9 = scalar_select 0, %s8, %s6
  $region1: #{tpu_custom_call.1} parent=0
    #allocation2 [shape = 'u8[65536]{0}', space=vmem, size = 0x10000, scoped, tag = 'input window, operand 3, single buffered']
    #allocation3 [shape = 's32[1]{0}', space=sflag, size = 0x4, scoped, tag = 'scoped memory for tpu_custom_call.1']
    #allocation4 [shape = 's32[1]{0}', space=sflag, size = 0x4, scoped, tag = 'scoped memory for tpu_custom_call.1']
    #allocation5 [shape = 'u8[4096]{0}', space=vmem, size = 0x1000, scoped, tag = 'output window, operand 0, single buffered']
    %10 = vsyncpa [#allocation3], 0
    %11 = vsyncpa [#allocation4], 0
    // Predicated region
    $region2: #{tpu_custom_call.1} parent=1 // pred_check
      _
    $region3: #{tpu_custom_call.1} parent=1 // pred_check_branch
      %13 = sbr.rel (0) target = $region5
    $region4: #{tpu_custom_call.1} parent=1 // pred_region
      _
    $region5: #{tpu_custom_call.1} parent=1 // pred_fallthru
      _
    // Predicated region
    $region6: #{tpu_custom_call.1} parent=1 // pred_check
      _
    $region7: #{tpu_custom_call.1} parent=1 // pred_check_branch
      %15 = sbr.rel (0) target = $region9
    $region8: #{tpu_custom_call.1} parent=1 // pred_region
      _
    $region9: #{tpu_custom_call.1} parent=1 // pred_fallthru
      _
    // Predicated region
    $region10: #{tpu_custom_call.1} parent=1 // pred_check
      _
    $region11: #{tpu_custom_call.1} parent=1 // pred_check_branch
      %17 = sbr.rel (0) target = $region13
    $region12: #{tpu_custom_call.1} parent=1 // pred_region
      _
    $region13: #{tpu_custom_call.1} parent=1 // pred_fallthru
      _
    // Predicated region
    $region14: #{tpu_custom_call.1} parent=1 // pred_check
      _
    $region15: #{tpu_custom_call.1} parent=1 // pred_check_branch
      %19 = sbr.rel (0) target = $region17
    $region16: #{tpu_custom_call.1} parent=1 // pred_region
      %s21 = ssub.s32 2048, 2048
      %22 = vsyncadd [#allocation3], %s21
      %s23 = sshll.u32 [#allocation2], 4
      %s24 = int_to_ptr.vmem [resolvable:$true] %s23
      %29 = dma.hbm_to_vmem [thread:$0]  %s3, 2048, %s24, [#allocation3], 128, 128, 8
    $region17: #{tpu_custom_call.1} parent=1 // pred_fallthru
      _
    // Predicated region
    $region18: #{tpu_custom_call.1} parent=1 // pred_check
      _
    $region19: #{tpu_custom_call.1} parent=1 // pred_check_branch
      %31 = sbr.rel (0) target = $region21
    $region20: #{tpu_custom_call.1} parent=1 // pred_region
      _
    $region21: #{tpu_custom_call.1} parent=1 // pred_fallthru
      _
    // Predicated region
    $region22: #{tpu_custom_call.1} parent=1 // pred_check
      _
    $region23: #{tpu_custom_call.1} parent=1 // pred_check_branch
      %33 = sbr.rel (0) target = $region25
    $region24: #{tpu_custom_call.1} parent=1 // pred_region
      %34 = dma.done [#allocation3], 2048
    $region25: #{tpu_custom_call.1} parent=1 // pred_fallthru
      _
    %v35 = vld [vmem:[%s0] sm:$0xff]
    %v36 = vld [vmem:[%s1] sm:$0x3]
    %v37 = vld [vmem:[%s2] sm:$0x1]
    %v39 = vlaneseq
    %v40 = vshrl.u32 %v39, 7
    %v41 = vsub.s32 0, %v40
    %v42 = vrot.slane %v37, %v41
    %vm44 = vcmask 15360
    %v46 = vsel %vm44, %v35, 0
    %vm48 = vcmask 1041408
    %v50 = vsel %vm48, %v36, 0
    %52 = vmatprep.subr.mxu0 0.0
    %53 = vmatpush1.msra.mxu0 %v50
    %54 = vmatprep.subr.mxu0 0.0
    %55 = vmatpush1.msra.mxu0 0.0
    %56 = vmatprep.subr.mxu0 0.0
    %57 = vmatpush1.msra.mxu0 0.0
    %58 = vmatprep.subr.mxu0 0.0
    %59 = vmatpush1.msra.mxu0 0.0
    %60 = vmatprep.subr.mxu0 0.0
    %61 = vmatpush1.msra.mxu0 0.0
    %62 = vmatprep.subr.mxu0 0.0
    %63 = vmatpush1.msra.mxu0 0.0
    %64 = vmatprep.subr.mxu0 0.0
    %65 = vmatpush1.msra.mxu0 0.0
    %66 = vmatprep.subr.mxu0 0.0
    %67 = vmatpush1.msra.mxu0 0.0
    %68 = vmatprep.subr.mxu0 0.0
    %69 = vmatpush1.msra.mxu0 0.0
    %70 = vmatprep.subr.mxu0 0.0
    %71 = vmatpush1.msra.mxu0 0.0
    %72 = vmatprep.subr.mxu0 0.0
    %73 = vmatpush1.msra.mxu0 0.0
    %74 = vmatprep.subr.mxu0 0.0
    %75 = vmatpush1.msra.mxu0 0.0
    %76 = vmatprep.subr.mxu0 0.0
    %77 = vmatpush1.msra.mxu0 0.0
    %78 = vmatprep.subr.mxu0 0.0
    %79 = vmatpush1.msra.mxu0 0.0
    %80 = vmatprep.subr.mxu0 0.0
    %81 = vmatpush1.msra.mxu0 0.0
    %82 = vmatprep.subr.mxu0 0.0
    %83 = vmatpush1.msra.mxu0 0.0
    %84 = vmatprep.subr.mxu0 0.0
    %85 = vmatpush1.msra.mxu0 0.0
    %86 = vmatprep.subr.mxu0 0.0
    %87 = vmatpush1.msra.mxu0 0.0
    %88 = vmatprep.subr.mxu0 0.0
    %89 = vmatpush1.msra.mxu0 0.0
    %90 = vmatprep.subr.mxu0 0.0
    %91 = vmatpush1.msra.mxu0 0.0
    %92 = vmatprep.subr.mxu0 0.0
    %93 = vmatpush1.msra.mxu0 0.0
    %94 = vmatprep.subr.mxu0 0.0
    %95 = vmatpush1.msra.mxu0 0.0
    %96 = vmatprep.subr.mxu0 0.0
    %97 = vmatpush1.msra.mxu0 0.0
    %98 = vmatprep.subr.mxu0 0.0
    %99 = vmatpush1.msra.mxu0 0.0
    %100 = vmatprep.subr.mxu0 0.0
    %101 = vmatpush1.msra.mxu0 0.0
    %102 = vmatprep.subr.mxu0 0.0
    %103 = vmatpush1.msra.mxu0 0.0
    %104 = vmatprep.subr.mxu0 0.0
    %105 = vmatpush1.msra.mxu0 0.0
    %106 = vmatprep.subr.mxu0 0.0
    %107 = vmatpush1.msra.mxu0 0.0
    %108 = vmatprep.subr.mxu0 0.0
    %109 = vmatpush1.msra.mxu0 0.0
    %110 = vmatprep.subr.mxu0 0.0
    %111 = vmatpush1.msra.mxu0 0.0
    %112 = vmatprep.subr.mxu0 0.0
    %113 = vmatpush1.msra.mxu0 0.0
    %114 = vmatprep.subr.mxu0 0.0
    %115 = vmatpush1.msra.mxu0 0.0
    %116 = vmatprep.mubr.f32.mxu0 0.0
    %117 = vmatmul.mubr.f32.gmra.mrb[0].mxu0 %v46
    %v118 = vpop.f32.mrb[0].mxu0
    %v119 = vadd.f32 %v42, %v118
    %v120 = vpop.f32.mrb[0].mxu0
    %121 = vdwg.mxu0
    %v122 = vmax.f32 %v119, 0.0
    %v123 = vld [vmem:[#allocation2] sm:$0xff]
    %v124 = vld [vmem:[#allocation2 + $0x8] sm:$0xff]
    %v125 = vld [vmem:[#allocation2 + $0x10] sm:$0xff]
    %v126 = vld [vmem:[#allocation2 + $0x18] sm:$0xff]
    %v127 = vld [vmem:[#allocation2 + $0x20] sm:$0xff]
    %v128 = vld [vmem:[#allocation2 + $0x28] sm:$0xff]
    %v129 = vld [vmem:[#allocation2 + $0x30] sm:$0xff]
    %v130 = vld [vmem:[#allocation2 + $0x38] sm:$0xff]
    %v131 = vld [vmem:[#allocation2 + $0x40] sm:$0xff]
    %v132 = vld [vmem:[#allocation2 + $0x48] sm:$0xff]
    %v133 = vld [vmem:[#allocation2 + $0x50] sm:$0xff]
    %v134 = vld [vmem:[#allocation2 + $0x58] sm:$0xff]
    %v135 = vld [vmem:[#allocation2 + $0x60] sm:$0xff]
    %v136 = vld [vmem:[#allocation2 + $0x68] sm:$0xff]
    %v137 = vld [vmem:[#allocation2 + $0x70] sm:$0xff]
    %v138 = vld [vmem:[#allocation2 + $0x78] sm:$0xff]
    %v139 = vld [vmem:[%s4] sm:$0x1]
    %v141 = vlaneseq
    %v142 = vshrl.u32 %v141, 7
    %v143 = vsub.s32 0, %v142
    %v144 = vrot.slane %v139, %v143
    %146 = vmatprep.subr.mxu0 0.0
    %147 = vmatpush1.msra.mxu0 %v123
    %148 = vmatprep.subr.mxu0 0.0
    %149 = vmatpush1.msra.mxu0 %v124
    %150 = vmatprep.subr.mxu0 0.0
    %151 = vmatpush1.msra.mxu0 %v125
    %152 = vmatprep.subr.mxu0 0.0
    %153 = vmatpush1.msra.mxu0 %v126
    %154 = vmatprep.subr.mxu0 0.0
    %155 = vmatpush1.msra.mxu0 %v127
    %156 = vmatprep.subr.mxu0 0.0
    %157 = vmatpush1.msra.mxu0 %v128
    %158 = vmatprep.subr.mxu0 0.0
    %159 = vmatpush1.msra.mxu0 %v129
    %160 = vmatprep.subr.mxu0 0.0
    %161 = vmatpush1.msra.mxu0 %v130
    %162 = vmatprep.subr.mxu0 0.0
    %163 = vmatpush1.msra.mxu0 %v131
    %164 = vmatprep.subr.mxu0 0.0
    %165 = vmatpush1.msra.mxu0 %v132
    %166 = vmatprep.subr.mxu0 0.0
    %167 = vmatpush1.msra.mxu0 %v133
    %168 = vmatprep.subr.mxu0 0.0
    %169 = vmatpush1.msra.mxu0 %v134
    %170 = vmatprep.subr.mxu0 0.0
    %171 = vmatpush1.msra.mxu0 %v135
    %172 = vmatprep.subr.mxu0 0.0
    %173 = vmatpush1.msra.mxu0 %v136
    %174 = vmatprep.subr.mxu0 0.0
    %175 = vmatpush1.msra.mxu0 %v137
    %176 = vmatprep.subr.mxu0 0.0
    %177 = vmatpush1.msra.mxu0 %v138
    %178 = vmatprep.subr.mxu0 0.0
    %179 = vmatpush1.msra.mxu0 0.0
    %180 = vmatprep.subr.mxu0 0.0
    %181 = vmatpush1.msra.mxu0 0.0
    %182 = vmatprep.subr.mxu0 0.0
    %183 = vmatpush1.msra.mxu0 0.0
    %184 = vmatprep.subr.mxu0 0.0
    %185 = vmatpush1.msra.mxu0 0.0
    %186 = vmatprep.subr.mxu0 0.0
    %187 = vmatpush1.msra.mxu0 0.0
    %188 = vmatprep.subr.mxu0 0.0
    %189 = vmatpush1.msra.mxu0 0.0
    %190 = vmatprep.subr.mxu0 0.0
    %191 = vmatpush1.msra.mxu0 0.0
    %192 = vmatprep.subr.mxu0 0.0
    %193 = vmatpush1.msra.mxu0 0.0
    %194 = vmatprep.subr.mxu0 0.0
    %195 = vmatpush1.msra.mxu0 0.0
    %196 = vmatprep.subr.mxu0 0.0
    %197 = vmatpush1.msra.mxu0 0.0
    %198 = vmatprep.subr.mxu0 0.0
    %199 = vmatpush1.msra.mxu0 0.0
    %200 = vmatprep.subr.mxu0 0.0
    %201 = vmatpush1.msra.mxu0 0.0
    %202 = vmatprep.subr.mxu0 0.0
    %203 = vmatpush1.msra.mxu0 0.0
    %204 = vmatprep.subr.mxu0 0.0
    %205 = vmatpush1.msra.mxu0 0.0
    %206 = vmatprep.subr.mxu0 0.0
    %207 = vmatpush1.msra.mxu0 0.0
    %208 = vmatprep.subr.mxu0 0.0
    %209 = vmatpush1.msra.mxu0 0.0
    %210 = vmatprep.mubr.f32.mxu0 0.0
    %211 = vmatmul.mubr.f32.gmra.mrb[0].mxu0 %v122
    %v212 = vpop.f32.mrb[0].mxu0
    %v213 = vadd.f32 %v144, %v212
    %v214 = vpop.f32.mrb[0].mxu0
    %215 = vdwg.mxu0
    %216 = vst [vmem:[#allocation5] sm:$0xff] %v213
    // Predicated region
    $region26: #{tpu_custom_call.1} parent=1 // pred_check
      _
    $region27: #{tpu_custom_call.1} parent=1 // pred_check_branch
      %218 = sbr.rel (0) target = $region29
    $region28: #{tpu_custom_call.1} parent=1 // pred_region
      %s220 = ssub.s32 128, 128
      %221 = vsyncadd [#allocation4], %s220
      %s223 = sshll.u32 [#allocation5], 4
      %s224 = int_to_ptr.vmem [resolvable:$true] %s223
      %226 = dma.vmem_to_hbm [thread:$0]  %s224, 128, %s5, [#allocation4]
    $region29: #{tpu_custom_call.1} parent=1 // pred_fallthru
      _
    // Predicated region
    $region30: #{tpu_custom_call.1} parent=1 // pred_check
      _
    $region31: #{tpu_custom_call.1} parent=1 // pred_check_branch
      %228 = sbr.rel (0) target = $region33
    $region32: #{tpu_custom_call.1} parent=1 // pred_region
      %229 = dma.done [#allocation4], 128
    $region33: #{tpu_custom_call.1} parent=1 // pred_fallthru
      _
    %230 = vsyncpa [#allocation3], 1
    %231 = vsyncpa [#allocation4], 1

</llo_original>
